<compile_context>
chip_gen: v7x
topology: tpu7x:2x2x1
jax: 0.10.0
libtpu: 0.0.40
codegen_flags: <defaults>
</compile_context>

<pallas_src>
import functools

import numpy as np
import jax
import jax.numpy as jnp
from jax.experimental import pallas as pl
from jax.experimental.pallas import tpu as pltpu


IN_F = 36       # real input features
PAD = 128       # lane padding for hidden dims (max real hidden dim is 100)
HEADS = 8       # fc4 (4) | fc7 (2) | fc8 (2) packed into output lanes 0..7
SUBLANE = 8     # f32/bf16-safe sublane granularity for the batch dim


# ----------------------------------------------------------------------------
# Kernel: whole forward pass on one (bm, ...) batch tile.
# ----------------------------------------------------------------------------
def net_kernel(x_ref, w1_ref, w_ref, b_ref, out_ref):
    # x_ref  : (bm, 36)       bf16 observations (narrow, no lane padding in HBM)
    # w1_ref : (36, 128)      bf16 fc1 weight, cols 50..127 zero
    # w_ref  : (3, 128, 128)  bf16 fc2 / fc3 / fused-heads weights (zero padded)
    # b_ref  : (4, 1, 128)    bf16 biases (zero padded)
    # out_ref: (bm, 8)        f32: lanes 0..3 = fc4, 4..5 = fc7, 6..7 = fc8
    h = jnp.dot(x_ref[...], w1_ref[...],
                preferred_element_type=jnp.float32) + b_ref[0]
    h = jnp.maximum(h, 0.0).astype(jnp.bfloat16)

    h = jnp.dot(h, w_ref[0], preferred_element_type=jnp.float32) + b_ref[1]
    h = jnp.maximum(h, 0.0).astype(jnp.bfloat16)

    h = jnp.dot(h, w_ref[1], preferred_element_type=jnp.float32) + b_ref[2]
    h = jnp.maximum(h, 0.0).astype(jnp.bfloat16)

    # fused heads: one MXU pass; store only the 8 real lanes (narrow output)
    y = jnp.dot(h, w_ref[2], preferred_element_type=jnp.float32) + b_ref[3]
    out_ref[...] = y[:, :HEADS].astype(out_ref.dtype)


# ----------------------------------------------------------------------------
# Parameter handling
# ----------------------------------------------------------------------------
def init_linear(key, in_f, out_f):
    """nn.Linear-style U(-1/sqrt(in), 1/sqrt(in)) init.
    Weight stored (in_f, out_f) (transposed vs. PyTorch), bias (1, out_f)."""
    kw, kb = jax.random.split(key)
    bound = 1.0 / np.sqrt(in_f)
    w = jax.random.uniform(kw, (in_f, out_f), jnp.float32, -bound, bound)
    b = jax.random.uniform(kb, (1, out_f), jnp.float32, -bound, bound)
    return w, b


def init_params(key):
    keys = jax.random.split(key, 6)
    return (
        init_linear(keys[0], 36, 50),    # fc1
        init_linear(keys[1], 50, 100),   # fc2
        init_linear(keys[2], 100, 32),   # fc3
        init_linear(keys[3], 32, 4),     # fc4
        init_linear(keys[4], 32, 2),     # fc7
        init_linear(keys[5], 32, 2),     # fc8
    )


def pack_params(params, dtype=jnp.bfloat16):
    """Pack parameters once (reused every call):
       w1_p   : (36, 128)      fc1
       w_slab : (3, 128, 128)  fc2, fc3, fused heads (fc4|fc7|fc8)
       b_slab : (4, 1, 128)    all biases
    All zero padded and cast to bf16 (MXU-native)."""
    (w1, b1), (w2, b2), (w3, b3), (w4, b4), (w7, b7), (w8, b8) = params

    w1_p = jnp.zeros((IN_F, PAD), jnp.float32).at[:, :50].set(w1)

    w_slab = jnp.zeros((3, PAD, PAD), jnp.float32)
    w_slab = w_slab.at[0, :50, :100].set(w2)
    w_slab = w_slab.at[1, :100, :32].set(w3)
    w_slab = w_slab.at[2, :32, 0:4].set(w4)      # fc4 -> lanes 0..3
    w_slab = w_slab.at[2, :32, 4:6].set(w7)      # fc7 -> lanes 4..5
    w_slab = w_slab.at[2, :32, 6:8].set(w8)      # fc8 -> lanes 6..7

    b_slab = jnp.zeros((4, 1, PAD), jnp.float32)
    b_slab = b_slab.at[0, :, :50].set(b1)
    b_slab = b_slab.at[1, :, :100].set(b2)
    b_slab = b_slab.at[2, :, :32].set(b3)
    b_slab = b_slab.at[3, :, 0:4].set(b4)
    b_slab = b_slab.at[3, :, 4:6].set(b7)
    b_slab = b_slab.at[3, :, 6:8].set(b8)

    return w1_p.astype(dtype), w_slab.astype(dtype), b_slab.astype(dtype)


# ----------------------------------------------------------------------------
# Forward wrapper (jitted: pad + kernel + output slices = one dispatch)
# ----------------------------------------------------------------------------
@functools.partial(jax.jit, static_argnames=("block_m",))
def net_forward(x, w1_p, w_slab, b_slab, block_m=1024):
    """Forward pass.

    x: a single observation with 36 elements (mirrors the PyTorch
       `.view(1, -1)` path) or a batch of observations of shape (M, 36).
    Returns (out, open_for_sell, open_for_purchase), leading dim M (M=1 for a
    single observation).

    block_m: max rows per batch tile (multiple of 8).  The batch is split into
    >=2 balanced tiles whenever it exceeds one sublane group so the v7x
    megacore can shard rows across both TensorCores.
    """
    assert block_m % SUBLANE == 0, "block_m must be a multiple of 8"

    x = jnp.asarray(x)
    if x.ndim == 2 and x.shape[-1] == IN_F:
        pass                                   # already (M, 36)
    elif x.size == IN_F:
        x = x.reshape(1, IN_F)                 # original `.view(1, -1)` path
    else:
        raise ValueError(f"expected (M, {IN_F}) or {IN_F} elements, got {x.shape}")
    m = x.shape[0]

    # Balanced tiling: pad the batch to the sublane granularity, then split it
    # into g >= 2 equal tiles (when there is more than one sublane group) so
    # both v7x TensorCores get work and a batch just over a tile boundary does
    # not pay for a whole extra empty tile.
    m_pad8 = pl.cdiv(m, SUBLANE) * SUBLANE
    g = 1 if m_pad8 <= SUBLANE else max(2, pl.cdiv(m_pad8, block_m))
    bm = pl.cdiv(pl.cdiv(m_pad8, g), SUBLANE) * SUBLANE
    m_pad = g * bm

    x_pad = jnp.zeros((m_pad, IN_F), jnp.bfloat16).at[:m].set(
        x.astype(jnp.bfloat16))

    y = pl.pallas_call(
        net_kernel,
        out_shape=jax.ShapeDtypeStruct((m_pad, HEADS), jnp.float32),
        grid=(g,),
        in_specs=[
            # streaming batch tile (last dim == full array dim -> legal narrow block)
            pl.BlockSpec((bm, IN_F), lambda i: (i, 0)),
            # grid-invariant (resident) parameters
            pl.BlockSpec((IN_F, PAD), lambda i: (0, 0)),
            pl.BlockSpec((3, PAD, PAD), lambda i: (0, 0, 0)),
            pl.BlockSpec((4, 1, PAD), lambda i: (0, 0, 0)),
        ],
        out_specs=pl.BlockSpec((bm, HEADS), lambda i: (i, 0)),   # narrow output
        compiler_params=pltpu.CompilerParams(
            dimension_semantics=("parallel",)),   # v7x: rows split across 2 TCs
    )(x_pad, w1_p, w_slab, b_slab)

    out = y[:m, 0:4]                 # fc4
    open_for_sell = y[:m, 4:6]       # fc7
    open_for_purchase = y[:m, 6:8]   # fc8
    return out, open_for_sell, open_for_purchase


# ----------------------------------------------------------------------------
# Pure-JAX f32 reference (for correctness checks)
# ----------------------------------------------------------------------------
def reference_forward(x, params):
    (w1, b1), (w2, b2), (w3, b3), (w4, b4), (w7, b7), (w8, b8) = params
    h = jnp.asarray(x, jnp.float32)
    if not (h.ndim == 2 and h.shape[-1] == IN_F):
        h = h.reshape(1, -1)
    h = jnp.maximum(h @ w1 + b1, 0.0)
    h = jnp.maximum(h @ w2 + b2, 0.0)
    h = jnp.maximum(h @ w3 + b3, 0.0)
    return h @ w4 + b4, h @ w7 + b7, h @ w8 + b8


if __name__ == "__main__":
    root = jax.random.PRNGKey(0)
    k_x, k_xb, k_p = jax.random.split(root, 3)

    params = init_params(k_p)
    w1_p, w_slab, b_slab = pack_params(params)   # packed once, reused every call

    # bf16 weights/activations with f32 accumulation -> ~1% level agreement
    RTOL, ATOL = 2e-2, 2e-2

    # --- single observation: exact semantics of the PyTorch module ----------
    x = jax.random.normal(k_x, (36,), jnp.float32)
    out, open_for_sell, open_for_purchase = net_forward(x, w1_p, w_slab, b_slab)
    jax.block_until_ready((out, open_for_sell, open_for_purchase))

    r_out, r_sell, r_buy = reference_forward(x, params)
    np.testing.assert_allclose(np.asarray(out), np.asarray(r_out), rtol=RTOL, atol=ATOL)
    np.testing.assert_allclose(np.asarray(open_for_sell), np.asarray(r_sell), rtol=RTOL, atol=ATOL)
    np.testing.assert_allclose(np.asarray(open_for_purchase), np.asarray(r_buy), rtol=RTOL, atol=ATOL)
    assert out.shape == (1, 4)
    assert open_for_sell.shape == (1, 2)
    assert open_for_purchase.shape == (1, 2)

    # --- small batched sanity check (same kernel, many agents/timesteps) ----
    xb = jax.random.normal(k_xb, (16, 36), jnp.float32)
    b_out, b_sell, b_buy = net_forward(xb, w1_p, w_slab, b_slab)
    jax.block_until_ready((b_out, b_sell, b_buy))
    rb_out, rb_sell, rb_buy = reference_forward(xb, params)
    np.testing.assert_allclose(np.asarray(b_out), np.asarray(rb_out), rtol=RTOL, atol=ATOL)
    np.testing.assert_allclose(np.asarray(b_sell), np.asarray(rb_sell), rtol=RTOL, atol=ATOL)
    np.testing.assert_allclose(np.asarray(b_buy), np.asarray(rb_buy), rtol=RTOL, atol=ATOL)
    assert b_out.shape == (16, 4) and b_sell.shape == (16, 2) and b_buy.shape == (16, 2)

    print("KERNEL_OK")
</pallas_src>

<mosaic_0001>
module attributes {stable_mosaic.version = 11 : i64} {
  func.func @net_kernel(%arg0: i32, %arg1: memref<8x36xbf16, #tpu.memory_space<vmem>>, %arg2: memref<36x128xbf16, #tpu.memory_space<vmem>>, %arg3: memref<3x128x128xbf16, #tpu.memory_space<vmem>>, %arg4: memref<4x1x128xbf16, #tpu.memory_space<vmem>>, %arg5: memref<8x8xf32, #tpu.memory_space<vmem>>) attributes {dimension_semantics = [#tpu.dimension_semantics<parallel>], iteration_bounds = array<i64: 1>, scalar_prefetch = 0 : i64, scratch_operands = 0 : i64, tpu.core_type = #tpu.core_type<tc>, window_params = [{transform_indices = @transform_0, window_bounds = array<i64: 8, 36>}, {pipeline_mode = #tpu.pipeline_mode<synchronous>, transform_indices = @transform_1, window_bounds = array<i64: 36, 128>}, {pipeline_mode = #tpu.pipeline_mode<synchronous>, transform_indices = @transform_2, window_bounds = array<i64: 3, 128, 128>}, {pipeline_mode = #tpu.pipeline_mode<synchronous>, transform_indices = @transform_3, window_bounds = array<i64: 4, 1, 128>}, {transform_indices = @transform_4, window_bounds = array<i64: 8, 8>}]} {
    %c0 = arith.constant 0 : index
    %c0_0 = arith.constant 0 : index
    %0 = vector.load %arg1[%c0, %c0_0] : memref<8x36xbf16, #tpu.memory_space<vmem>>, vector<8x36xbf16>
    %c0_1 = arith.constant 0 : index
    %c0_2 = arith.constant 0 : index
    %1 = vector.load %arg2[%c0_1, %c0_2] : memref<36x128xbf16, #tpu.memory_space<vmem>>, vector<36x128xbf16>
    %cst = arith.constant dense<0.000000e+00> : vector<8x128xf32>
    %2 = tpu.matmul %0, %1, %cst {dimension_numbers = #tpu.dot_dimension_numbers<[1], [0], [0], [1], [0, 0, 1, 1], [], []>} : vector<8x36xbf16>, vector<36x128xbf16>, vector<8x128xf32> -> vector<8x128xf32>
    %c0_3 = arith.constant 0 : index
    %c0_4 = arith.constant 0 : index
    %c0_5 = arith.constant 0 : index
    %3 = vector.load %arg4[%c0_3, %c0_4, %c0_5] : memref<4x1x128xbf16, #tpu.memory_space<vmem>>, vector<1x1x128xbf16>
    %4 = vector.shape_cast %3 : vector<1x1x128xbf16> to vector<1x128xbf16>
    %5 = arith.extf %4 : vector<1x128xbf16> to vector<1x128xf32>
    %6 = vector.broadcast %5 : vector<1x128xf32> to vector<8x128xf32>
    %7 = arith.addf %2, %6 : vector<8x128xf32>
    %cst_6 = arith.constant 0.000000e+00 : f32
    %8 = vector.broadcast %cst_6 : f32 to vector<8x128xf32>
    %9 = arith.maximumf %7, %8 : vector<8x128xf32>
    %10 = arith.truncf %9 : vector<8x128xf32> to vector<8x128xbf16>
    %c0_7 = arith.constant 0 : index
    %c0_8 = arith.constant 0 : index
    %c0_9 = arith.constant 0 : index
    %11 = vector.load %arg3[%c0_7, %c0_8, %c0_9] : memref<3x128x128xbf16, #tpu.memory_space<vmem>>, vector<1x128x128xbf16>
    %12 = vector.shape_cast %11 : vector<1x128x128xbf16> to vector<128x128xbf16>
    %cst_10 = arith.constant dense<0.000000e+00> : vector<8x128xf32>
    %13 = tpu.matmul %10, %12, %cst_10 {dimension_numbers = #tpu.dot_dimension_numbers<[1], [0], [0], [1], [0, 0, 1, 1], [], []>} : vector<8x128xbf16>, vector<128x128xbf16>, vector<8x128xf32> -> vector<8x128xf32>
    %c1 = arith.constant 1 : index
    %c0_11 = arith.constant 0 : index
    %c0_12 = arith.constant 0 : index
    %14 = vector.load %arg4[%c1, %c0_11, %c0_12] : memref<4x1x128xbf16, #tpu.memory_space<vmem>>, vector<1x1x128xbf16>
    %15 = vector.shape_cast %14 : vector<1x1x128xbf16> to vector<1x128xbf16>
    %16 = arith.extf %15 : vector<1x128xbf16> to vector<1x128xf32>
    %17 = vector.broadcast %16 : vector<1x128xf32> to vector<8x128xf32>
    %18 = arith.addf %13, %17 : vector<8x128xf32>
    %cst_13 = arith.constant 0.000000e+00 : f32
    %19 = vector.broadcast %cst_13 : f32 to vector<8x128xf32>
    %20 = arith.maximumf %18, %19 : vector<8x128xf32>
    %21 = arith.truncf %20 : vector<8x128xf32> to vector<8x128xbf16>
    %c1_14 = arith.constant 1 : index
    %c0_15 = arith.constant 0 : index
    %c0_16 = arith.constant 0 : index
    %22 = vector.load %arg3[%c1_14, %c0_15, %c0_16] : memref<3x128x128xbf16, #tpu.memory_space<vmem>>, vector<1x128x128xbf16>
    %23 = vector.shape_cast %22 : vector<1x128x128xbf16> to vector<128x128xbf16>
    %cst_17 = arith.constant dense<0.000000e+00> : vector<8x128xf32>
    %24 = tpu.matmul %21, %23, %cst_17 {dimension_numbers = #tpu.dot_dimension_numbers<[1], [0], [0], [1], [0, 0, 1, 1], [], []>} : vector<8x128xbf16>, vector<128x128xbf16>, vector<8x128xf32> -> vector<8x128xf32>
    %c2 = arith.constant 2 : index
    %c0_18 = arith.constant 0 : index
    %c0_19 = arith.constant 0 : index
    %25 = vector.load %arg4[%c2, %c0_18, %c0_19] : memref<4x1x128xbf16, #tpu.memory_space<vmem>>, vector<1x1x128xbf16>
    %26 = vector.shape_cast %25 : vector<1x1x128xbf16> to vector<1x128xbf16>
    %27 = arith.extf %26 : vector<1x128xbf16> to vector<1x128xf32>
    %28 = vector.broadcast %27 : vector<1x128xf32> to vector<8x128xf32>
    %29 = arith.addf %24, %28 : vector<8x128xf32>
    %cst_20 = arith.constant 0.000000e+00 : f32
    %30 = vector.broadcast %cst_20 : f32 to vector<8x128xf32>
    %31 = arith.maximumf %29, %30 : vector<8x128xf32>
    %32 = arith.truncf %31 : vector<8x128xf32> to vector<8x128xbf16>
    %c2_21 = arith.constant 2 : index
    %c0_22 = arith.constant 0 : index
    %c0_23 = arith.constant 0 : index
    %33 = vector.load %arg3[%c2_21, %c0_22, %c0_23] : memref<3x128x128xbf16, #tpu.memory_space<vmem>>, vector<1x128x128xbf16>
    %34 = vector.shape_cast %33 : vector<1x128x128xbf16> to vector<128x128xbf16>
    %cst_24 = arith.constant dense<0.000000e+00> : vector<8x128xf32>
    %35 = tpu.matmul %32, %34, %cst_24 {dimension_numbers = #tpu.dot_dimension_numbers<[1], [0], [0], [1], [0, 0, 1, 1], [], []>} : vector<8x128xbf16>, vector<128x128xbf16>, vector<8x128xf32> -> vector<8x128xf32>
    %c3 = arith.constant 3 : index
    %c0_25 = arith.constant 0 : index
    %c0_26 = arith.constant 0 : index
    %36 = vector.load %arg4[%c3, %c0_25, %c0_26] : memref<4x1x128xbf16, #tpu.memory_space<vmem>>, vector<1x1x128xbf16>
    %37 = vector.shape_cast %36 : vector<1x1x128xbf16> to vector<1x128xbf16>
    %38 = arith.extf %37 : vector<1x128xbf16> to vector<1x128xf32>
    %39 = vector.broadcast %38 : vector<1x128xf32> to vector<8x128xf32>
    %40 = arith.addf %35, %39 : vector<8x128xf32>
    %41 = vector.extract_strided_slice %40 {offsets = [0, 0], sizes = [8, 8], strides = [1, 1]} : vector<8x128xf32> to vector<8x8xf32>
    %c0_27 = arith.constant 0 : index
    %c0_28 = arith.constant 0 : index
    %42 = vector.load %arg5[%c0_27, %c0_28] : memref<8x8xf32, #tpu.memory_space<vmem>>, vector<8x8xf32>
    tpu.vector_store %arg5[%c0_27, %c0_28], %41 {strides = array<i32>} : memref<8x8xf32, #tpu.memory_space<vmem>>, vector<8x8xf32>,
    return
  }
  func.func @transform_0(%arg0: i32) -> (i32, i32) {
    %c0_i32 = arith.constant 0 : i32
    %c0_i32_0 = arith.constant 0 : i32
    return %arg0, %c0_i32 : i32, i32
  }
  func.func @transform_1(%arg0: i32) -> (i32, i32) {
    %c0_i32 = arith.constant 0 : i32
    %c0_i32_0 = arith.constant 0 : i32
    %c0_i32_1 = arith.constant 0 : i32
    return %c0_i32, %c0_i32_0 : i32, i32
  }
  func.func @transform_2(%arg0: i32) -> (i32, i32, i32) {
    %c0_i32 = arith.constant 0 : i32
    %c0_i32_0 = arith.constant 0 : i32
    %c0_i32_1 = arith.constant 0 : i32
    %c0_i32_2 = arith.constant 0 : i32
    return %c0_i32, %c0_i32_0, %c0_i32_1 : i32, i32, i32
  }
  func.func @transform_3(%arg0: i32) -> (i32, i32, i32) {
    %c0_i32 = arith.constant 0 : i32
    %c0_i32_0 = arith.constant 0 : i32
    %c0_i32_1 = arith.constant 0 : i32
    %c0_i32_2 = arith.constant 0 : i32
    return %c0_i32, %c0_i32_0, %c0_i32_1 : i32, i32, i32
  }
  func.func @transform_4(%arg0: i32) -> (i32, i32) {
    %c0_i32 = arith.constant 0 : i32
    %c0_i32_0 = arith.constant 0 : i32
    return %arg0, %c0_i32 : i32, i32
  }
}

</mosaic_0001>

<llo_original>
// kernel: net_forward.1
$region0: #{net_forward.1}
  #allocation0 [shape = 'u32[]', space=smem, size = 0x4, offset = 0x4, fixed_abs, tag = 'smem constant byte address 0x4 - core index']
  #allocation1 [shape = 'u32[144,128]{1,0:T(1,128)}', space=vmem, size = 0x12000, scoped, tag = 'internal scratch']
  %s0 = inlined_call_operand.vmem [shape: bf16[8,36], index: 0, kind: input, shape index: {}]
  %s1 = inlined_call_operand.hbm [shape: bf16[36,128], index: 1, kind: input, shape index: {}]
  %s2 = inlined_call_operand.hbm [shape: bf16[3,128,128], index: 2, kind: input, shape index: {}]
  %s3 = inlined_call_operand.vmem [shape: bf16[4,1,128], index: 3, kind: input, shape index: {}]
  %s4 = inlined_call_operand.vmem [shape: f32[8,8], index: 4, kind: output, shape index: {}]
  %s5 = sld [smem:[#allocation0]]
  $region34: #{net_forward.1} parent=0
    _
  %s7 = ssub.s32 1, %s5
  %s8 = scalar_select 0, %s7, %s5
  $region1: #{net_forward.1} parent=0
    #allocation2 [shape = 'u8[10240]{0}', space=vmem, size = 0x2800, scoped, tag = 'input window, operand 1, single buffered']
    #allocation3 [shape = 's32[1]{0}', space=sflag, size = 0x4, scoped, tag = 'scoped memory for net_forward.1']
    #allocation4 [shape = 'u8[98304]{0}', space=vmem, size = 0x18000, scoped, tag = 'input window, operand 2, single buffered']
    #allocation5 [shape = 's32[1]{0}', space=sflag, size = 0x4, scoped, tag = 'scoped memory for net_forward.1']
    %9 = vsyncpa [#allocation3], 0
    %10 = vsyncpa [#allocation5], 0
    // Predicated region
    $region2: #{net_forward.1} parent=1 // pred_check
      _
    $region3: #{net_forward.1} parent=1 // pred_check_branch
      %12 = sbr.rel (0) target = $region5
    $region4: #{net_forward.1} parent=1 // pred_region
      _
    $region5: #{net_forward.1} parent=1 // pred_fallthru
      _
    // Predicated region
    $region6: #{net_forward.1} parent=1 // pred_check
      _
    $region7: #{net_forward.1} parent=1 // pred_check_branch
      %14 = sbr.rel (0) target = $region9
    $region8: #{net_forward.1} parent=1 // pred_region
      %s16 = ssub.s32 320, 320
      %17 = vsyncadd [#allocation3], %s16
      %s18 = sshll.u32 [#allocation2], 4
      %s19 = int_to_ptr.vmem [resolvable:$true] %s18
      %24 = dma.hbm_to_vmem [thread:$0]  %s1, 320, %s19, [#allocation3], 64, 64, 4
    $region9: #{net_forward.1} parent=1 // pred_fallthru
      _
    // Predicated region
    $region10: #{net_forward.1} parent=1 // pred_check
      _
    $region11: #{net_forward.1} parent=1 // pred_check_branch
      %26 = sbr.rel (0) target = $region13
    $region12: #{net_forward.1} parent=1 // pred_region
      %s28 = ssub.s32 3072, 3072
      %29 = vsyncadd [#allocation5], %s28
      %s30 = sshll.u32 [#allocation4], 4
      %s31 = int_to_ptr.vmem [resolvable:$true] %s30
      %36 = dma.hbm_to_vmem [thread:$0]  %s2, 3072, %s31, [#allocation5], 64, 64, 4
    $region13: #{net_forward.1} parent=1 // pred_fallthru
      _
    // Predicated region
    $region14: #{net_forward.1} parent=1 // pred_check
      _
    $region15: #{net_forward.1} parent=1 // pred_check_branch
      %38 = sbr.rel (0) target = $region17
    $region16: #{net_forward.1} parent=1 // pred_region
      _
    $region17: #{net_forward.1} parent=1 // pred_fallthru
      _
    // Predicated region
    $region18: #{net_forward.1} parent=1 // pred_check
      _
    $region19: #{net_forward.1} parent=1 // pred_check_branch
      %40 = sbr.rel (0) target = $region21
    $region20: #{net_forward.1} parent=1 // pred_region
      %41 = dma.done [#allocation3], 320
    $region21: #{net_forward.1} parent=1 // pred_fallthru
      _
    // Predicated region
    $region22: #{net_forward.1} parent=1 // pred_check
      _
    $region23: #{net_forward.1} parent=1 // pred_check_branch
      %43 = sbr.rel (0) target = $region25
    $region24: #{net_forward.1} parent=1 // pred_region
      %44 = dma.done [#allocation5], 3072
    $region25: #{net_forward.1} parent=1 // pred_fallthru
      _
    %v46 = vld [vmem:[%s0] sm:$0xf]
    %v47 = vld [vmem:[#allocation2] sm:$0xf]
    %v48 = vld [vmem:[#allocation2 + $0x4] sm:$0xf]
    %v49 = vld [vmem:[#allocation2 + $0x8] sm:$0xf]
    %v50 = vld [vmem:[#allocation2 + $0xc] sm:$0xf]
    %v51 = vld [vmem:[#allocation2 + $0x10] sm:$0x3]
    %v52 = vld [vmem:[%s3] sm:$0x1]
    %v53 = vunpack.c.l.bf16 %v52
    %v54 = vlaneseq
    %v55 = vshrl.u32 %v54, 7
    %v56 = vsub.s32 0, %v55
    %v57 = vrot.slane %v53, %v56
    %v63 = vunpack.c.l.b16 %v47
    %v64 = vunpack.c.l.b16 %v48
    %v65 = vunpack.c.l.b16 %v49
    %v66 = vunpack.c.l.b16 %v50
    %v67 = vunpack.c.l.b16 %v51
    %v68 = vpack.c.b16 %v64, %v63
    %v69 = vpack.c.b16 %v66, %v65
    %v70 = vpack.c.b16 %v67, %v67
    %vm73 = vcmask 293888
    %v75 = vsel %vm73, %v46, 0
    %vm77 = vcmask 1041408
    %v79 = vsel %vm77, %v70, 0
    %81 = vmatprep.subr.bf16.mxu0 0
    %82 = vmatpush1.bf16.msra.mxu0 %v68
    %83 = vmatprep.subr.bf16.mxu0 0
    %84 = vmatpush1.bf16.msra.mxu0 %v69
    %85 = vmatprep.subr.bf16.mxu0 0
    %86 = vmatpush1.bf16.msra.mxu0 %v79
    %87 = vmatprep.subr.bf16.mxu0 0
    %88 = vmatpush1.bf16.msra.mxu0 0
    %89 = vmatprep.subr.bf16.mxu0 0
    %90 = vmatpush1.bf16.msra.mxu0 0
    %91 = vmatprep.subr.bf16.mxu0 0
    %92 = vmatpush1.bf16.msra.mxu0 0
    %93 = vmatprep.subr.bf16.mxu0 0
    %94 = vmatpush1.bf16.msra.mxu0 0
    %95 = vmatprep.subr.bf16.mxu0 0
    %96 = vmatpush1.bf16.msra.mxu0 0
    %97 = vmatprep.subr.bf16.mxu0 0
    %98 = vmatpush1.bf16.msra.mxu0 0
    %99 = vmatprep.subr.bf16.mxu0 0
    %100 = vmatpush1.bf16.msra.mxu0 0
    %101 = vmatprep.subr.bf16.mxu0 0
    %102 = vmatpush1.bf16.msra.mxu0 0
    %103 = vmatprep.subr.bf16.mxu0 0
    %104 = vmatpush1.bf16.msra.mxu0 0
    %105 = vmatprep.subr.bf16.mxu0 0
    %106 = vmatpush1.bf16.msra.mxu0 0
    %107 = vmatprep.subr.bf16.mxu0 0
    %108 = vmatpush1.bf16.msra.mxu0 0
    %109 = vmatprep.subr.bf16.mxu0 0
    %110 = vmatpush1.bf16.msra.mxu0 0
    %111 = vmatprep.subr.bf16.mxu0 0
    %112 = vmatpush1.bf16.msra.mxu0 0
    %113 = vmatprep.mubr.bf16.mxu0 0
    %114 = vmatmul.mubr.bf16.gmra.mrb[0].mxu0 %v75
    %v115 = vpop.f32.mrb[0].mxu0
    %v116 = vadd.f32 %v57, %v115
    %v117 = vpop.f32.mrb[0].mxu0
    %v118 = vpop.f32.mrb[0].mxu0
    %v119 = vpop.f32.mrb[0].mxu0
    %120 = vdwg.mxu0
    %v121 = vmax.f32 %v116, 0.0
    %v122 = vpack.c.bf16 %v121, %v121
    %v123 = vld [vmem:[#allocation4] sm:$0xf]
    %v124 = vld [vmem:[#allocation4 + $0x4] sm:$0xf]
    %v125 = vld [vmem:[#allocation4 + $0x8] sm:$0xf]
    %v126 = vld [vmem:[#allocation4 + $0xc] sm:$0xf]
    %v127 = vld [vmem:[#allocation4 + $0x10] sm:$0xf]
    %v128 = vld [vmem:[#allocation4 + $0x14] sm:$0xf]
    %v129 = vld [vmem:[#allocation4 + $0x18] sm:$0xf]
    %v130 = vld [vmem:[#allocation4 + $0x1c] sm:$0xf]
    %v131 = vld [vmem:[#allocation4 + $0x20] sm:$0xf]
    %v132 = vld [vmem:[#allocation4 + $0x24] sm:$0xf]
    %v133 = vld [vmem:[#allocation4 + $0x28] sm:$0xf]
    %v134 = vld [vmem:[#allocation4 + $0x2c] sm:$0xf]
    %v135 = vld [vmem:[#allocation4 + $0x30] sm:$0xf]
    %v136 = vld [vmem:[#allocation4 + $0x34] sm:$0xf]
    %v137 = vld [vmem:[#allocation4 + $0x38] sm:$0xf]
    %v138 = vld [vmem:[#allocation4 + $0x3c] sm:$0xf]
    %s139 = scalar_lea.vmem %s3, 1
    %v140 = vld [vmem:[%s139] sm:$0x1]
    %v141 = vunpack.c.l.bf16 %v140
    %v142 = vlaneseq
    %v143 = vshrl.u32 %v142, 7
    %v144 = vsub.s32 0, %v143
    %v145 = vrot.slane %v141, %v144
    %v162 = vunpack.c.l.b16 %v123
    %v163 = vunpack.c.l.b16 %v124
    %v164 = vunpack.c.l.b16 %v125
    %v165 = vunpack.c.l.b16 %v126
    %v166 = vunpack.c.l.b16 %v127
    %v167 = vunpack.c.l.b16 %v128
    %v168 = vunpack.c.l.b16 %v129
    %v169 = vunpack.c.l.b16 %v130
    %v170 = vunpack.c.l.b16 %v131
    %v171 = vunpack.c.l.b16 %v132
    %v172 = vunpack.c.l.b16 %v133
    %v173 = vunpack.c.l.b16 %v134
    %v174 = vunpack.c.l.b16 %v135
    %v175 = vunpack.c.l.b16 %v136
    %v176 = vunpack.c.l.b16 %v137
    %v177 = vunpack.c.l.b16 %v138
    %v178 = vpack.c.b16 %v163, %v162
    %v179 = vpack.c.b16 %v165, %v164
    %v180 = vpack.c.b16 %v167, %v166
    %v181 = vpack.c.b16 %v169, %v168
    %v182 = vpack.c.b16 %v171, %v170
    %v183 = vpack.c.b16 %v173, %v172
    %v184 = vpack.c.b16 %v175, %v174
    %v185 = vpack.c.b16 %v177, %v176
    %194 = vmatprep.subr.bf16.mxu0 0
    %195 = vmatpush1.bf16.msra.mxu0 %v178
    %196 = vmatprep.subr.bf16.mxu0 0
    %197 = vmatpush1.bf16.msra.mxu0 %v179
    %198 = vmatprep.subr.bf16.mxu0 0
    %199 = vmatpush1.bf16.msra.mxu0 %v180
    %200 = vmatprep.subr.bf16.mxu0 0
    %201 = vmatpush1.bf16.msra.mxu0 %v181
    %202 = vmatprep.subr.bf16.mxu0 0
    %203 = vmatpush1.bf16.msra.mxu0 %v182
    %204 = vmatprep.subr.bf16.mxu0 0
    %205 = vmatpush1.bf16.msra.mxu0 %v183
    %206 = vmatprep.subr.bf16.mxu0 0
    %207 = vmatpush1.bf16.msra.mxu0 %v184
    %208 = vmatprep.subr.bf16.mxu0 0
    %209 = vmatpush1.bf16.msra.mxu0 %v185
    %210 = vmatprep.subr.bf16.mxu0 0
    %211 = vmatpush1.bf16.msra.mxu0 0
    %212 = vmatprep.subr.bf16.mxu0 0
    %213 = vmatpush1.bf16.msra.mxu0 0
    %214 = vmatprep.subr.bf16.mxu0 0
    %215 = vmatpush1.bf16.msra.mxu0 0
    %216 = vmatprep.subr.bf16.mxu0 0
    %217 = vmatpush1.bf16.msra.mxu0 0
    %218 = vmatprep.subr.bf16.mxu0 0
    %219 = vmatpush1.bf16.msra.mxu0 0
    %220 = vmatprep.subr.bf16.mxu0 0
    %221 = vmatpush1.bf16.msra.mxu0 0
    %222 = vmatprep.subr.bf16.mxu0 0
    %223 = vmatpush1.bf16.msra.mxu0 0
    %224 = vmatprep.subr.bf16.mxu0 0
    %225 = vmatpush1.bf16.msra.mxu0 0
    %226 = vmatprep.mubr.bf16.mxu0 0
    %227 = vmatmul.mubr.bf16.gmra.mrb[0].mxu0 %v122
    %v228 = vpop.f32.mrb[0].mxu0
    %v229 = vadd.f32 %v145, %v228
    %v230 = vpop.f32.mrb[0].mxu0
    %v231 = vpop.f32.mrb[0].mxu0
    %v232 = vpop.f32.mrb[0].mxu0
    %233 = vdwg.mxu0
    %v234 = vmax.f32 %v229, 0.0
    %v235 = vpack.c.bf16 %v234, %v234
    %s236 = scalar_lea.vmem [#allocation4], 64
    %v237 = vld [vmem:[%s236] sm:$0xf]
    %v238 = vld [vmem:[%s236 + $0x4] sm:$0xf]
    %v239 = vld [vmem:[%s236 + $0x8] sm:$0xf]
    %v240 = vld [vmem:[%s236 + $0xc] sm:$0xf]
    %v241 = vld [vmem:[%s236 + $0x10] sm:$0xf]
    %v242 = vld [vmem:[%s236 + $0x14] sm:$0xf]
    %v243 = vld [vmem:[%s236 + $0x18] sm:$0xf]
    %v244 = vld [vmem:[%s236 + $0x1c] sm:$0xf]
    %v245 = vld [vmem:[%s236 + $0x20] sm:$0xf]
    %v246 = vld [vmem:[%s236 + $0x24] sm:$0xf]
    %v247 = vld [vmem:[%s236 + $0x28] sm:$0xf]
    %v248 = vld [vmem:[%s236 + $0x2c] sm:$0xf]
    %v249 = vld [vmem:[%s236 + $0x30] sm:$0xf]
    %v250 = vld [vmem:[%s236 + $0x34] sm:$0xf]
    %v251 = vld [vmem:[%s236 + $0x38] sm:$0xf]
    %v252 = vld [vmem:[%s236 + $0x3c] sm:$0xf]
    %s253 = scalar_lea.vmem %s3, 2
    %v254 = vld [vmem:[%s253] sm:$0x1]
    %v255 = vunpack.c.l.bf16 %v254
    %v256 = vlaneseq
    %v257 = vshrl.u32 %v256, 7
    %v258 = vsub.s32 0, %v257
    %v259 = vrot.slane %v255, %v258
    %v276 = vunpack.c.l.b16 %v237
    %v277 = vunpack.c.l.b16 %v238
    %v278 = vunpack.c.l.b16 %v239
    %v279 = vunpack.c.l.b16 %v240
    %v280 = vunpack.c.l.b16 %v241
    %v281 = vunpack.c.l.b16 %v242
    %v282 = vunpack.c.l.b16 %v243
    %v283 = vunpack.c.l.b16 %v244
    %v284 = vunpack.c.l.b16 %v245
    %v285 = vunpack.c.l.b16 %v246
    %v286 = vunpack.c.l.b16 %v247
    %v287 = vunpack.c.l.b16 %v248
    %v288 = vunpack.c.l.b16 %v249
    %v289 = vunpack.c.l.b16 %v250
    %v290 = vunpack.c.l.b16 %v251
    %v291 = vunpack.c.l.b16 %v252
    %v292 = vpack.c.b16 %v277, %v276
    %v293 = vpack.c.b16 %v279, %v278
    %v294 = vpack.c.b16 %v281, %v280
    %v295 = vpack.c.b16 %v283, %v282
    %v296 = vpack.c.b16 %v285, %v284
    %v297 = vpack.c.b16 %v287, %v286
    %v298 = vpack.c.b16 %v289, %v288
    %v299 = vpack.c.b16 %v291, %v290
    %308 = vmatprep.subr.bf16.mxu0 0
    %309 = vmatpush1.bf16.msra.mxu0 %v292
    %310 = vmatprep.subr.bf16.mxu0 0
    %311 = vmatpush1.bf16.msra.mxu0 %v293
    %312 = vmatprep.subr.bf16.mxu0 0
    %313 = vmatpush1.bf16.msra.mxu0 %v294
    %314 = vmatprep.subr.bf16.mxu0 0
    %315 = vmatpush1.bf16.msra.mxu0 %v295
    %316 = vmatprep.subr.bf16.mxu0 0
    %317 = vmatpush1.bf16.msra.mxu0 %v296
    %318 = vmatprep.subr.bf16.mxu0 0
    %319 = vmatpush1.bf16.msra.mxu0 %v297
    %320 = vmatprep.subr.bf16.mxu0 0
    %321 = vmatpush1.bf16.msra.mxu0 %v298
    %322 = vmatprep.subr.bf16.mxu0 0
    %323 = vmatpush1.bf16.msra.mxu0 %v299
    %324 = vmatprep.subr.bf16.mxu0 0
    %325 = vmatpush1.bf16.msra.mxu0 0
    %326 = vmatprep.subr.bf16.mxu0 0
    %327 = vmatpush1.bf16.msra.mxu0 0
    %328 = vmatprep.subr.bf16.mxu0 0
    %329 = vmatpush1.bf16.msra.mxu0 0
    %330 = vmatprep.subr.bf16.mxu0 0
    %331 = vmatpush1.bf16.msra.mxu0 0
    %332 = vmatprep.subr.bf16.mxu0 0
    %333 = vmatpush1.bf16.msra.mxu0 0
    %334 = vmatprep.subr.bf16.mxu0 0
    %335 = vmatpush1.bf16.msra.mxu0 0
    %336 = vmatprep.subr.bf16.mxu0 0
    %337 = vmatpush1.bf16.msra.mxu0 0
    %338 = vmatprep.subr.bf16.mxu0 0
    %339 = vmatpush1.bf16.msra.mxu0 0
    %340 = vmatprep.mubr.bf16.mxu0 0
    %341 = vmatmul.mubr.bf16.gmra.mrb[0].mxu0 %v235
    %v342 = vpop.f32.mrb[0].mxu0
    %v343 = vadd.f32 %v259, %v342
    %v344 = vpop.f32.mrb[0].mxu0
    %v345 = vpop.f32.mrb[0].mxu0
    %v346 = vpop.f32.mrb[0].mxu0
    %347 = vdwg.mxu0
    %v348 = vmax.f32 %v343, 0.0
    %v349 = vpack.c.bf16 %v348, %v348
    %s350 = scalar_lea.vmem [#allocation4], 128
    %v351 = vld [vmem:[%s350] sm:$0xf]
    %v352 = vld [vmem:[%s350 + $0x4] sm:$0xf]
    %v353 = vld [vmem:[%s350 + $0x8] sm:$0xf]
    %v354 = vld [vmem:[%s350 + $0xc] sm:$0xf]
    %v355 = vld [vmem:[%s350 + $0x10] sm:$0xf]
    %v356 = vld [vmem:[%s350 + $0x14] sm:$0xf]
    %v357 = vld [vmem:[%s350 + $0x18] sm:$0xf]
    %v358 = vld [vmem:[%s350 + $0x1c] sm:$0xf]
    %v359 = vld [vmem:[%s350 + $0x20] sm:$0xf]
    %v360 = vld [vmem:[%s350 + $0x24] sm:$0xf]
    %v361 = vld [vmem:[%s350 + $0x28] sm:$0xf]
    %v362 = vld [vmem:[%s350 + $0x2c] sm:$0xf]
    %v363 = vld [vmem:[%s350 + $0x30] sm:$0xf]
    %v364 = vld [vmem:[%s350 + $0x34] sm:$0xf]
    %v365 = vld [vmem:[%s350 + $0x38] sm:$0xf]
    %v366 = vld [vmem:[%s350 + $0x3c] sm:$0xf]
    %s367 = scalar_lea.vmem %s3, 3
    %v368 = vld [vmem:[%s367] sm:$0x1]
    %v369 = vunpack.c.l.bf16 %v368
    %v370 = vlaneseq
    %v371 = vshrl.u32 %v370, 7
    %v372 = vsub.s32 0, %v371
    %v373 = vrot.slane %v369, %v372
    %v390 = vunpack.c.l.b16 %v351
    %v391 = vunpack.c.l.b16 %v352
    %v392 = vunpack.c.l.b16 %v353
    %v393 = vunpack.c.l.b16 %v354
    %v394 = vunpack.c.l.b16 %v355
    %v395 = vunpack.c.l.b16 %v356
    %v396 = vunpack.c.l.b16 %v357
    %v397 = vunpack.c.l.b16 %v358
    %v398 = vunpack.c.l.b16 %v359
    %v399 = vunpack.c.l.b16 %v360
    %v400 = vunpack.c.l.b16 %v361
    %v401 = vunpack.c.l.b16 %v362
    %v402 = vunpack.c.l.b16 %v363
    %v403 = vunpack.c.l.b16 %v364
    %v404 = vunpack.c.l.b16 %v365
    %v405 = vunpack.c.l.b16 %v366
    %v406 = vpack.c.b16 %v391, %v390
    %v407 = vpack.c.b16 %v393, %v392
    %v408 = vpack.c.b16 %v395, %v394
    %v409 = vpack.c.b16 %v397, %v396
    %v410 = vpack.c.b16 %v399, %v398
    %v411 = vpack.c.b16 %v401, %v400
    %v412 = vpack.c.b16 %v403, %v402
    %v413 = vpack.c.b16 %v405, %v404
    %422 = vmatprep.subr.bf16.mxu0 0
    %423 = vmatpush1.bf16.msra.mxu0 %v406
    %424 = vmatprep.subr.bf16.mxu0 0
    %425 = vmatpush1.bf16.msra.mxu0 %v407
    %426 = vmatprep.subr.bf16.mxu0 0
    %427 = vmatpush1.bf16.msra.mxu0 %v408
    %428 = vmatprep.subr.bf16.mxu0 0
    %429 = vmatpush1.bf16.msra.mxu0 %v409
    %430 = vmatprep.subr.bf16.mxu0 0
    %431 = vmatpush1.bf16.msra.mxu0 %v410
    %432 = vmatprep.subr.bf16.mxu0 0
    %433 = vmatpush1.bf16.msra.mxu0 %v411
    %434 = vmatprep.subr.bf16.mxu0 0
    %435 = vmatpush1.bf16.msra.mxu0 %v412
    %436 = vmatprep.subr.bf16.mxu0 0
    %437 = vmatpush1.bf16.msra.mxu0 %v413
    %438 = vmatprep.subr.bf16.mxu0 0
    %439 = vmatpush1.bf16.msra.mxu0 0
    %440 = vmatprep.subr.bf16.mxu0 0
    %441 = vmatpush1.bf16.msra.mxu0 0
    %442 = vmatprep.subr.bf16.mxu0 0
    %443 = vmatpush1.bf16.msra.mxu0 0
    %444 = vmatprep.subr.bf16.mxu0 0
    %445 = vmatpush1.bf16.msra.mxu0 0
    %446 = vmatprep.subr.bf16.mxu0 0
    %447 = vmatpush1.bf16.msra.mxu0 0
    %448 = vmatprep.subr.bf16.mxu0 0
    %449 = vmatpush1.bf16.msra.mxu0 0
    %450 = vmatprep.subr.bf16.mxu0 0
    %451 = vmatpush1.bf16.msra.mxu0 0
    %452 = vmatprep.subr.bf16.mxu0 0
    %453 = vmatpush1.bf16.msra.mxu0 0
    %454 = vmatprep.mubr.bf16.mxu0 0
    %455 = vmatmul.mubr.bf16.gmra.mrb[0].mxu0 %v349
    %v456 = vpop.f32.mrb[0].mxu0
    %v457 = vadd.f32 %v373, %v456
    %v458 = vpop.f32.mrb[0].mxu0
    %v459 = vpop.f32.mrb[0].mxu0
    %v460 = vpop.f32.mrb[0].mxu0
    %461 = vdwg.mxu0
    %vm462 = vcmask 64512
    %463 = vst.msk [vmem:[%s4] sm:$0xff] %vm462, %v457
    // Predicated region
    $region26: #{net_forward.1} parent=1 // pred_check
      _
    $region27: #{net_forward.1} parent=1 // pred_check_branch
      %465 = sbr.rel (0) target = $region29
    $region28: #{net_forward.1} parent=1 // pred_region
      _
    $region29: #{net_forward.1} parent=1 // pred_fallthru
      _
    // Predicated region
    $region30: #{net_forward.1} parent=1 // pred_check
      _
    $region31: #{net_forward.1} parent=1 // pred_check_branch
      %467 = sbr.rel (0) target = $region33
    $region32: #{net_forward.1} parent=1 // pred_region
      _
    $region33: #{net_forward.1} parent=1 // pred_fallthru
      _
    %468 = vsyncpa [#allocation3], 1
    %469 = vsyncpa [#allocation5], 1

</llo_original>
